<compile_context>
chip_gen: v5e
topology: v5e:2x2
jax: 0.10.0
libtpu: 0.0.40
codegen_flags: <defaults>
</compile_context>

<pallas_src>
import functools

import jax
import jax.numpy as jnp
from jax.experimental import pallas as pl
from jax.experimental.pallas import tpu as pltpu

_LANES = 128


def _round_up(n, m):
    return ((n + m - 1) // m) * m


def _cdiv(a, b):
    return (a + b - 1) // b


def _mlp_kernel(x_ref, w1_ref, b1_ref, w2_ref, b2_ref, w3_ref, b3_ref,
                w4_ref, b4_ref, o_ref):
    """Entire RetrainNet forward for one batch tile, fused in VMEM.

    x_ref: [tb, D] f32 tile (cast to bf16 in-kernel; VPU has plenty of slack).
    w*: bf16 [in, out] full arrays, VMEM-resident (w4/b4 lane-padded for MXU).
    b*: f32 [1, out].  All matmuls accumulate in f32 on the MXU.
    o_ref: [tb, O] with O the true output width (lane-thin store is cheap; the
    store slot is nowhere near saturated).
    """
    h = x_ref[...].astype(jnp.bfloat16)
    h = jnp.dot(h, w1_ref[...], preferred_element_type=jnp.float32) + b1_ref[...]
    h = jnp.maximum(h, 0.0).astype(jnp.bfloat16)                  # ReLU
    h = jnp.dot(h, w2_ref[...], preferred_element_type=jnp.float32) + b2_ref[...]
    h = jnp.maximum(h, 0.0).astype(jnp.bfloat16)                  # ReLU
    h = jnp.dot(h, w3_ref[...], preferred_element_type=jnp.float32) + b3_ref[...]
    h = jnp.maximum(h, 0.0).astype(jnp.bfloat16)                  # ReLU
    out = jnp.dot(h, w4_ref[...], preferred_element_type=jnp.float32) + b4_ref[...]
    # w4/b4 are lane-padded for the MXU; write back only the true O columns.
    o_ref[...] = out[:, :o_ref.shape[-1]].astype(o_ref.dtype)


def prepare_params(params):
    """One-time cast/pad of weights (outside the per-call path).

    Weights -> bf16 [in, out]; biases -> f32 [1, out]; w4/b4 lane-padded to a
    multiple of 128 so the final matmul has an MXU-friendly N (the kernel
    slices the result back to O before storing).
    Returns (prepared_dict, output_dim).
    """
    out_dim = int(params["w4"].shape[-1])
    o_mxu = _round_up(out_dim, _LANES)

    def w(a):
        return jnp.asarray(a, jnp.bfloat16)

    def b(a):
        return jnp.asarray(a, jnp.float32).reshape(1, -1)

    prepared = dict(
        w1=w(params["w1"]), b1=b(params["b1"]),
        w2=w(params["w2"]), b2=b(params["b2"]),
        w3=w(params["w3"]), b3=b(params["b3"]),
        w4=jnp.pad(w(params["w4"]), ((0, 0), (0, o_mxu - out_dim))),
        b4=jnp.pad(b(params["b4"]), ((0, 0), (0, o_mxu - out_dim))),
    )
    return prepared, out_dim


def _choose_batch_tile(B, D):
    """Batch tile for the 1-D 'parallel' grid.

    * B <= 2048: one grid step covering the whole batch -- on single-TC chips
      (v5e/v6e) the grid is a serial loop, so splitting small batches only adds
      ~0.35us/step of fixed overhead.
    * Large B: 1K-4K-row tiles (multiple of 256 -> 16-aligned for bf16 sublane
      packing) amortize per-step overhead while keeping >= ~8 tiles so both
      v7x TensorCores get work via the parallel grid axis.
    """
    if B <= 2048:
        return _round_up(B, 8)
    tb = _round_up(_cdiv(B, 8), 256)
    tb = max(1024, min(tb, 4096))
    # VMEM guard: double-buffered f32 x tile + ~6 f32[128] temporaries per row.
    bytes_per_row = 8 * D + 24 * _LANES
    tb = min(tb, max(256, ((24 << 20) // bytes_per_row) // 256 * 256))
    return tb


@functools.partial(jax.jit, static_argnames=("out_dim", "block_b"))
def retrain_net_forward(x, prepared, *, out_dim, block_b=None):
    """Pallas implementation of RetrainNet.forward.

    x: [B, input_dim] float32; prepared: output of prepare_params().
    """
    B, D = x.shape
    H = prepared["w1"].shape[-1]
    O = int(out_dim)
    O_mxu = prepared["w4"].shape[-1]

    tb = int(block_b) if block_b is not None else _choose_batch_tile(B, D)
    grid = (_cdiv(B, tb),)   # ragged last block: OOB reads garbage, OOB writes dropped

    # Advisory cost hint for XLA's scheduler.
    flops = 2 * B * (D * H + H * H + H * H + H * O_mxu)
    bytes_accessed = (
        B * D * 4 + B * O * 4                                      # x in (f32), out (f32)
        + sum(prepared[k].size for k in ("w1", "w2", "w3", "w4")) * 2
        + sum(prepared[k].size for k in ("b1", "b2", "b3", "b4")) * 4)
    cost = pl.CostEstimate(flops=flops, transcendentals=0,
                           bytes_accessed=bytes_accessed)

    # Weights/biases are grid-invariant: untiled, VMEM-resident refs (no
    # per-step double-buffering).
    vmem_full = pl.BlockSpec(memory_space=pltpu.MemorySpace.VMEM)

    out = pl.pallas_call(
        _mlp_kernel,
        out_shape=jax.ShapeDtypeStruct((B, O), x.dtype),
        grid_spec=pltpu.PrefetchScalarGridSpec(
            num_scalar_prefetch=0,
            grid=grid,
            in_specs=[pl.BlockSpec((tb, D), lambda i: (i, 0))]     # x tile (pipelined)
                     + [vmem_full] * 8,                            # w1..b4
            out_specs=pl.BlockSpec((tb, O), lambda i: (i, 0)),     # unpadded output
        ),
        compiler_params=pltpu.CompilerParams(
            dimension_semantics=("parallel",),
            vmem_limit_bytes=32 * 1024 * 1024),
        cost_estimate=cost,
    )(x, prepared["w1"], prepared["b1"], prepared["w2"], prepared["b2"],
      prepared["w3"], prepared["b3"], prepared["w4"], prepared["b4"])
    return out


class RetrainNetPallas:
    """Pallas TPU equivalent of the PyTorch RetrainNet module (forward only)."""

    def __init__(self, params):
        self.params, self.out_dim = prepare_params(params)

    def __call__(self, x, block_b=None):
        return retrain_net_forward(x, self.params, out_dim=self.out_dim,
                                   block_b=block_b)


def init_params(key, input_dim, hidden=128, output_dim=1):
    """Deterministic synthetic parameters (PyTorch-style init, stored as [in, out])."""
    ks = jax.random.split(key, 8)

    def lin(kw, kb, fan_in, fan_out):
        bound = 1.0 / jnp.sqrt(fan_in)
        w = jax.random.uniform(kw, (fan_in, fan_out), jnp.float32, -bound, bound)
        b = jax.random.uniform(kb, (1, fan_out), jnp.float32, -bound, bound)
        return w, b

    w1, b1 = lin(ks[0], ks[1], input_dim, hidden)
    w2, b2 = lin(ks[2], ks[3], hidden, hidden)
    w3, b3 = lin(ks[4], ks[5], hidden, hidden)
    w4, b4 = lin(ks[6], ks[7], hidden, output_dim)
    return dict(w1=w1, b1=b1, w2=w2, b2=b2, w3=w3, b3=b3, w4=w4, b4=b4)


def reference_forward(x, p):
    """Reference with the same numerics (bf16 matmul inputs, f32 accumulate)."""
    bf = jnp.bfloat16

    def lin(h, w, b):
        return jnp.dot(h.astype(bf), w.astype(bf),
                       preferred_element_type=jnp.float32) + jnp.asarray(b, jnp.float32)

    h = jnp.maximum(lin(x, p["w1"], p["b1"]), 0.0)
    h = jnp.maximum(lin(h, p["w2"], p["b2"]), 0.0)
    h = jnp.maximum(lin(h, p["w3"], p["b3"]), 0.0)
    return lin(h, p["w4"], p["b4"])


if __name__ == "__main__":
    key = jax.random.PRNGKey(0)
    k_x, k_x2, k_p = jax.random.split(key, 3)

    batch, input_dim, output_dim = 8, 32, 1
    x = jax.random.normal(k_x, (batch, input_dim), jnp.float32)
    params = init_params(k_p, input_dim, hidden=128, output_dim=output_dim)
    net = RetrainNetPallas(params)

    # Small batch, single-tile grid.
    out = jax.block_until_ready(net(x))
    ref = reference_forward(x, params)
    assert out.shape == (batch, output_dim)
    assert jnp.allclose(out, ref, atol=1e-2, rtol=1e-2)

    # Larger batch: default single-tile path ...
    batch2 = 24
    x2 = jax.random.normal(k_x2, (batch2, input_dim), jnp.float32)
    out2 = jax.block_until_ready(net(x2))
    ref2 = reference_forward(x2, params)
    assert out2.shape == (batch2, output_dim)
    assert jnp.allclose(out2, ref2, atol=1e-2, rtol=1e-2)

    # ... and an explicit multi-step pipelined grid (3 tiles of 8 rows).
    out3 = jax.block_until_ready(net(x2, block_b=8))
    assert out3.shape == (batch2, output_dim)
    assert jnp.allclose(out3, ref2, atol=1e-2, rtol=1e-2)

    print("KERNEL_OK")
</pallas_src>

<mosaic_0001>
module attributes {stable_mosaic.version = 11 : i64} {
  func.func @_mlp_kernel(%arg0: i32, %arg1: memref<8x32xf32, #tpu.memory_space<vmem>>, %arg2: memref<32x128xbf16, #tpu.memory_space<vmem>>, %arg3: memref<1x128xf32, #tpu.memory_space<vmem>>, %arg4: memref<128x128xbf16, #tpu.memory_space<vmem>>, %arg5: memref<1x128xf32, #tpu.memory_space<vmem>>, %arg6: memref<128x128xbf16, #tpu.memory_space<vmem>>, %arg7: memref<1x128xf32, #tpu.memory_space<vmem>>, %arg8: memref<128x128xbf16, #tpu.memory_space<vmem>>, %arg9: memref<1x128xf32, #tpu.memory_space<vmem>>, %arg10: memref<8x1xf32, #tpu.memory_space<vmem>>) attributes {dimension_semantics = [#tpu.dimension_semantics<parallel>], iteration_bounds = array<i64: 1>, scalar_prefetch = 0 : i64, scratch_operands = 0 : i64, tpu.core_type = #tpu.core_type<tc>, window_params = [{transform_indices = @transform_0, window_bounds = array<i64: 8, 32>}, {pipeline_mode = #tpu.pipeline_mode<synchronous>, transform_indices = @transform_1, window_bounds = array<i64: 32, 128>}, {pipeline_mode = #tpu.pipeline_mode<synchronous>, transform_indices = @transform_2, window_bounds = array<i64: 1, 128>}, {pipeline_mode = #tpu.pipeline_mode<synchronous>, transform_indices = @transform_3, window_bounds = array<i64: 128, 128>}, {pipeline_mode = #tpu.pipeline_mode<synchronous>, transform_indices = @transform_4, window_bounds = array<i64: 1, 128>}, {pipeline_mode = #tpu.pipeline_mode<synchronous>, transform_indices = @transform_5, window_bounds = array<i64: 128, 128>}, {pipeline_mode = #tpu.pipeline_mode<synchronous>, transform_indices = @transform_6, window_bounds = array<i64: 1, 128>}, {pipeline_mode = #tpu.pipeline_mode<synchronous>, transform_indices = @transform_7, window_bounds = array<i64: 128, 128>}, {pipeline_mode = #tpu.pipeline_mode<synchronous>, transform_indices = @transform_8, window_bounds = array<i64: 1, 128>}, {transform_indices = @transform_9, window_bounds = array<i64: 8, 1>}]} {
    %c0 = arith.constant 0 : index
    %c0_0 = arith.constant 0 : index
    %0 = vector.load %arg1[%c0, %c0_0] : memref<8x32xf32, #tpu.memory_space<vmem>>, vector<8x32xf32>
    %1 = arith.truncf %0 : vector<8x32xf32> to vector<8x32xbf16>
    %c0_1 = arith.constant 0 : index
    %c0_2 = arith.constant 0 : index
    %2 = vector.load %arg2[%c0_1, %c0_2] : memref<32x128xbf16, #tpu.memory_space<vmem>>, vector<32x128xbf16>
    %cst = arith.constant dense<0.000000e+00> : vector<8x128xf32>
    %3 = tpu.matmul %1, %2, %cst {dimension_numbers = #tpu.dot_dimension_numbers<[1], [0], [0], [1], [0, 0, 1, 1], [], []>} : vector<8x32xbf16>, vector<32x128xbf16>, vector<8x128xf32> -> vector<8x128xf32>
    %c0_3 = arith.constant 0 : index
    %c0_4 = arith.constant 0 : index
    %4 = vector.load %arg3[%c0_3, %c0_4] : memref<1x128xf32, #tpu.memory_space<vmem>>, vector<1x128xf32>
    %5 = vector.broadcast %4 : vector<1x128xf32> to vector<8x128xf32>
    %6 = arith.addf %3, %5 : vector<8x128xf32>
    %cst_5 = arith.constant 0.000000e+00 : f32
    %7 = vector.broadcast %cst_5 : f32 to vector<8x128xf32>
    %8 = arith.maximumf %6, %7 : vector<8x128xf32>
    %9 = arith.truncf %8 : vector<8x128xf32> to vector<8x128xbf16>
    %c0_6 = arith.constant 0 : index
    %c0_7 = arith.constant 0 : index
    %10 = vector.load %arg4[%c0_6, %c0_7] : memref<128x128xbf16, #tpu.memory_space<vmem>>, vector<128x128xbf16>
    %cst_8 = arith.constant dense<0.000000e+00> : vector<8x128xf32>
    %11 = tpu.matmul %9, %10, %cst_8 {dimension_numbers = #tpu.dot_dimension_numbers<[1], [0], [0], [1], [0, 0, 1, 1], [], []>} : vector<8x128xbf16>, vector<128x128xbf16>, vector<8x128xf32> -> vector<8x128xf32>
    %c0_9 = arith.constant 0 : index
    %c0_10 = arith.constant 0 : index
    %12 = vector.load %arg5[%c0_9, %c0_10] : memref<1x128xf32, #tpu.memory_space<vmem>>, vector<1x128xf32>
    %13 = vector.broadcast %12 : vector<1x128xf32> to vector<8x128xf32>
    %14 = arith.addf %11, %13 : vector<8x128xf32>
    %cst_11 = arith.constant 0.000000e+00 : f32
    %15 = vector.broadcast %cst_11 : f32 to vector<8x128xf32>
    %16 = arith.maximumf %14, %15 : vector<8x128xf32>
    %17 = arith.truncf %16 : vector<8x128xf32> to vector<8x128xbf16>
    %c0_12 = arith.constant 0 : index
    %c0_13 = arith.constant 0 : index
    %18 = vector.load %arg6[%c0_12, %c0_13] : memref<128x128xbf16, #tpu.memory_space<vmem>>, vector<128x128xbf16>
    %cst_14 = arith.constant dense<0.000000e+00> : vector<8x128xf32>
    %19 = tpu.matmul %17, %18, %cst_14 {dimension_numbers = #tpu.dot_dimension_numbers<[1], [0], [0], [1], [0, 0, 1, 1], [], []>} : vector<8x128xbf16>, vector<128x128xbf16>, vector<8x128xf32> -> vector<8x128xf32>
    %c0_15 = arith.constant 0 : index
    %c0_16 = arith.constant 0 : index
    %20 = vector.load %arg7[%c0_15, %c0_16] : memref<1x128xf32, #tpu.memory_space<vmem>>, vector<1x128xf32>
    %21 = vector.broadcast %20 : vector<1x128xf32> to vector<8x128xf32>
    %22 = arith.addf %19, %21 : vector<8x128xf32>
    %cst_17 = arith.constant 0.000000e+00 : f32
    %23 = vector.broadcast %cst_17 : f32 to vector<8x128xf32>
    %24 = arith.maximumf %22, %23 : vector<8x128xf32>
    %25 = arith.truncf %24 : vector<8x128xf32> to vector<8x128xbf16>
    %c0_18 = arith.constant 0 : index
    %c0_19 = arith.constant 0 : index
    %26 = vector.load %arg8[%c0_18, %c0_19] : memref<128x128xbf16, #tpu.memory_space<vmem>>, vector<128x128xbf16>
    %cst_20 = arith.constant dense<0.000000e+00> : vector<8x128xf32>
    %27 = tpu.matmul %25, %26, %cst_20 {dimension_numbers = #tpu.dot_dimension_numbers<[1], [0], [0], [1], [0, 0, 1, 1], [], []>} : vector<8x128xbf16>, vector<128x128xbf16>, vector<8x128xf32> -> vector<8x128xf32>
    %c0_21 = arith.constant 0 : index
    %c0_22 = arith.constant 0 : index
    %28 = vector.load %arg9[%c0_21, %c0_22] : memref<1x128xf32, #tpu.memory_space<vmem>>, vector<1x128xf32>
    %29 = vector.broadcast %28 : vector<1x128xf32> to vector<8x128xf32>
    %30 = arith.addf %27, %29 : vector<8x128xf32>
    %31 = vector.extract_strided_slice %30 {offsets = [0, 0], sizes = [8, 1], strides = [1, 1]} : vector<8x128xf32> to vector<8x1xf32>
    %c0_23 = arith.constant 0 : index
    %c0_24 = arith.constant 0 : index
    %32 = vector.load %arg10[%c0_23, %c0_24] : memref<8x1xf32, #tpu.memory_space<vmem>>, vector<8x1xf32>
    tpu.vector_store %arg10[%c0_23, %c0_24], %31 {strides = array<i32>} : memref<8x1xf32, #tpu.memory_space<vmem>>, vector<8x1xf32>,
    return
  }
  func.func @transform_0(%arg0: i32) -> (i32, i32) {
    %c0_i32 = arith.constant 0 : i32
    %c0_i32_0 = arith.constant 0 : i32
    return %arg0, %c0_i32 : i32, i32
  }
  func.func @transform_1(%arg0: i32) -> (i32, i32) {
    %c0_i32 = arith.constant 0 : i32
    %c0_i32_0 = arith.constant 0 : i32
    %c0_i32_1 = arith.constant 0 : i32
    return %c0_i32, %c0_i32_0 : i32, i32
  }
  func.func @transform_2(%arg0: i32) -> (i32, i32) {
    %c0_i32 = arith.constant 0 : i32
    %c0_i32_0 = arith.constant 0 : i32
    %c0_i32_1 = arith.constant 0 : i32
    return %c0_i32, %c0_i32_0 : i32, i32
  }
  func.func @transform_3(%arg0: i32) -> (i32, i32) {
    %c0_i32 = arith.constant 0 : i32
    %c0_i32_0 = arith.constant 0 : i32
    %c0_i32_1 = arith.constant 0 : i32
    return %c0_i32, %c0_i32_0 : i32, i32
  }
  func.func @transform_4(%arg0: i32) -> (i32, i32) {
    %c0_i32 = arith.constant 0 : i32
    %c0_i32_0 = arith.constant 0 : i32
    %c0_i32_1 = arith.constant 0 : i32
    return %c0_i32, %c0_i32_0 : i32, i32
  }
  func.func @transform_5(%arg0: i32) -> (i32, i32) {
    %c0_i32 = arith.constant 0 : i32
    %c0_i32_0 = arith.constant 0 : i32
    %c0_i32_1 = arith.constant 0 : i32
    return %c0_i32, %c0_i32_0 : i32, i32
  }
  func.func @transform_6(%arg0: i32) -> (i32, i32) {
    %c0_i32 = arith.constant 0 : i32
    %c0_i32_0 = arith.constant 0 : i32
    %c0_i32_1 = arith.constant 0 : i32
    return %c0_i32, %c0_i32_0 : i32, i32
  }
  func.func @transform_7(%arg0: i32) -> (i32, i32) {
    %c0_i32 = arith.constant 0 : i32
    %c0_i32_0 = arith.constant 0 : i32
    %c0_i32_1 = arith.constant 0 : i32
    return %c0_i32, %c0_i32_0 : i32, i32
  }
  func.func @transform_8(%arg0: i32) -> (i32, i32) {
    %c0_i32 = arith.constant 0 : i32
    %c0_i32_0 = arith.constant 0 : i32
    %c0_i32_1 = arith.constant 0 : i32
    return %c0_i32, %c0_i32_0 : i32, i32
  }
  func.func @transform_9(%arg0: i32) -> (i32, i32) {
    %c0_i32 = arith.constant 0 : i32
    %c0_i32_0 = arith.constant 0 : i32
    return %arg0, %c0_i32 : i32, i32
  }
}

</mosaic_0001>

<llo_original>
// kernel: retrain_net_forward.1
$region0: #{retrain_net_forward.1}
  #allocation0 [shape = 'u32[]', space=smem, size = 0x4, offset = 0x4, fixed_abs, tag = 'smem constant byte address 0x4 - core index']
  #allocation1 [shape = 'u32[72,128]{1,0:T(1,128)}', space=vmem, size = 0x9000, scoped, tag = 'internal scratch']
  %s0 = inlined_call_operand.hbm [shape: f32[8,32], index: 0, kind: input, shape index: {}]
  %s1 = inlined_call_operand.hbm [shape: bf16[32,128], index: 1, kind: input, shape index: {}]
  %s2 = inlined_call_operand.hbm [shape: f32[1,128], index: 2, kind: input, shape index: {}]
  %s3 = inlined_call_operand.hbm [shape: bf16[128,128], index: 3, kind: input, shape index: {}]
  %s4 = inlined_call_operand.vmem [shape: f32[1,128], index: 4, kind: input, shape index: {}]
  %s5 = inlined_call_operand.hbm [shape: bf16[128,128], index: 5, kind: input, shape index: {}]
  %s6 = inlined_call_operand.vmem [shape: f32[1,128], index: 6, kind: input, shape index: {}]
  %s7 = inlined_call_operand.hbm [shape: bf16[128,128], index: 7, kind: input, shape index: {}]
  %s8 = inlined_call_operand.vmem [shape: f32[1,128], index: 8, kind: input, shape index: {}]
  %s9 = inlined_call_operand.vmem [shape: f32[8,1], index: 9, kind: output, shape index: {}]
  %s10 = sld [smem:[#allocation0]]
  $region70: #{retrain_net_forward.1} parent=0
    _
  %s12 = ssub.s32 1, %s10
  %s13 = scalar_select 0, %s12, %s10
  $region1: #{retrain_net_forward.1} parent=0
    #allocation2 [shape = 'u8[4096]{0}', space=vmem, size = 0x1000, scoped, tag = 'input window, operand 0, single buffered']
    #allocation3 [shape = 's32[1]{0}', space=sflag, size = 0x4, scoped, tag = 'scoped memory for retrain_net_forward.1']
    #allocation4 [shape = 'u8[8192]{0}', space=vmem, size = 0x2000, scoped, tag = 'input window, operand 1, single buffered']
    #allocation5 [shape = 's32[1]{0}', space=sflag, size = 0x4, scoped, tag = 'scoped memory for retrain_net_forward.1']
    #allocation6 [shape = 'u8[512]{0}', space=vmem, size = 0x400, scoped, tag = 'input window, operand 2, single buffered']
    #allocation7 [shape = 'u8[32768]{0}', space=vmem, size = 0x8000, scoped, tag = 'input window, operand 3, single buffered']
    #allocation8 [shape = 's32[1]{0}', space=sflag, size = 0x4, scoped, tag = 'scoped memory for retrain_net_forward.1']
    #allocation9 [shape = 'u8[32768]{0}', space=vmem, size = 0x8000, scoped, tag = 'input window, operand 5, single buffered']
    #allocation10 [shape = 'u8[32768]{0}', space=vmem, size = 0x8000, scoped, tag = 'input window, operand 7, single buffered']
    #allocation11 [shape = 's32[1]{0}', space=sflag, size = 0x4, scoped, tag = 'scoped memory for retrain_net_forward.1']
    %14 = vsyncpa [#allocation3], 0
    %15 = vsyncpa [#allocation5], 0
    %16 = vsyncpa [#allocation8], 0
    %17 = vsyncpa [#allocation11], 0
    // Predicated region
    $region2: #{retrain_net_forward.1} parent=1 // pred_check
      _
    $region3: #{retrain_net_forward.1} parent=1 // pred_check_branch
      %19 = sbr.rel (0) target = $region5
    $region4: #{retrain_net_forward.1} parent=1 // pred_region
      %21 = vsyncadd [#allocation3], 0
      %s23 = sshll.u32 %s0, 4
      %s24 = int_to_ptr.hbm [resolvable:$true] %s23
      %s25 = sshll.u32 [#allocation2], 4
      %s26 = int_to_ptr.vmem [resolvable:$true] %s25
      %28 = dma.hbm_to_vmem [thread:$0]  %s24, 128, %s26, [#allocation3]
    $region5: #{retrain_net_forward.1} parent=1 // pred_fallthru
      _
    // Predicated region
    $region6: #{retrain_net_forward.1} parent=1 // pred_check
      _
    $region7: #{retrain_net_forward.1} parent=1 // pred_check_branch
      %30 = sbr.rel (0) target = $region9
    $region8: #{retrain_net_forward.1} parent=1 // pred_region
      %32 = vsyncadd [#allocation5], 0
      %s33 = sshll.u32 %s1, 4
      %s34 = int_to_ptr.hbm [resolvable:$true] %s33
      %s35 = sshll.u32 [#allocation4], 4
      %s36 = int_to_ptr.vmem [resolvable:$true] %s35
      %41 = dma.hbm_to_vmem [thread:$0]  %s34, 256, %s36, [#allocation5], 64, 64, 4
    $region9: #{retrain_net_forward.1} parent=1 // pred_fallthru
      _
    // Predicated region
    $region10: #{retrain_net_forward.1} parent=1 // pred_check
      _
    $region11: #{retrain_net_forward.1} parent=1 // pred_check_branch
      %43 = sbr.rel (0) target = $region13
    $region12: #{retrain_net_forward.1} parent=1 // pred_region
      %45 = vsyncadd [#allocation5], 0
      %s47 = sshll.u32 %s2, 4
      %s48 = int_to_ptr.hbm [resolvable:$true] %s47
      %s49 = sshll.u32 [#allocation6], 4
      %s50 = int_to_ptr.vmem [resolvable:$true] %s49
      %52 = dma.hbm_to_vmem [thread:$0]  %s48, 16, %s50, [#allocation5]
    $region13: #{retrain_net_forward.1} parent=1 // pred_fallthru
      _
    // Predicated region
    $region14: #{retrain_net_forward.1} parent=1 // pred_check
      _
    $region15: #{retrain_net_forward.1} parent=1 // pred_check_branch
      %54 = sbr.rel (0) target = $region17
    $region16: #{retrain_net_forward.1} parent=1 // pred_region
      %56 = vsyncadd [#allocation8], 0
      %s57 = sshll.u32 %s3, 4
      %s58 = int_to_ptr.hbm [resolvable:$true] %s57
      %s59 = sshll.u32 [#allocation7], 4
      %s60 = int_to_ptr.vmem [resolvable:$true] %s59
      %65 = dma.hbm_to_vmem [thread:$0]  %s58, 1024, %s60, [#allocation8], 64, 64, 4
    $region17: #{retrain_net_forward.1} parent=1 // pred_fallthru
      _
    // Predicated region
    $region18: #{retrain_net_forward.1} parent=1 // pred_check
      _
    $region19: #{retrain_net_forward.1} parent=1 // pred_check_branch
      %67 = sbr.rel (0) target = $region21
    $region20: #{retrain_net_forward.1} parent=1 // pred_region
      _
    $region21: #{retrain_net_forward.1} parent=1 // pred_fallthru
      _
    // Predicated region
    $region22: #{retrain_net_forward.1} parent=1 // pred_check
      _
    $region23: #{retrain_net_forward.1} parent=1 // pred_check_branch
      %69 = sbr.rel (0) target = $region25
    $region24: #{retrain_net_forward.1} parent=1 // pred_region
      %71 = vsyncadd [#allocation8], 0
      %s72 = sshll.u32 %s5, 4
      %s73 = int_to_ptr.hbm [resolvable:$true] %s72
      %s74 = sshll.u32 [#allocation9], 4
      %s75 = int_to_ptr.vmem [resolvable:$true] %s74
      %80 = dma.hbm_to_vmem [thread:$0]  %s73, 1024, %s75, [#allocation8], 64, 64, 4
    $region25: #{retrain_net_forward.1} parent=1 // pred_fallthru
      _
    // Predicated region
    $region26: #{retrain_net_forward.1} parent=1 // pred_check
      _
    $region27: #{retrain_net_forward.1} parent=1 // pred_check_branch
      %82 = sbr.rel (0) target = $region29
    $region28: #{retrain_net_forward.1} parent=1 // pred_region
      _
    $region29: #{retrain_net_forward.1} parent=1 // pred_fallthru
      _
    // Predicated region
    $region30: #{retrain_net_forward.1} parent=1 // pred_check
      _
    $region31: #{retrain_net_forward.1} parent=1 // pred_check_branch
      %84 = sbr.rel (0) target = $region33
    $region32: #{retrain_net_forward.1} parent=1 // pred_region
      %86 = vsyncadd [#allocation11], 0
      %s87 = sshll.u32 %s7, 4
      %s88 = int_to_ptr.hbm [resolvable:$true] %s87
      %s89 = sshll.u32 [#allocation10], 4
      %s90 = int_to_ptr.vmem [resolvable:$true] %s89
      %95 = dma.hbm_to_vmem [thread:$0]  %s88, 1024, %s90, [#allocation11], 64, 64, 4
    $region33: #{retrain_net_forward.1} parent=1 // pred_fallthru
      _
    // Predicated region
    $region34: #{retrain_net_forward.1} parent=1 // pred_check
      _
    $region35: #{retrain_net_forward.1} parent=1 // pred_check_branch
      %97 = sbr.rel (0) target = $region37
    $region36: #{retrain_net_forward.1} parent=1 // pred_region
      _
    $region37: #{retrain_net_forward.1} parent=1 // pred_fallthru
      _
    // Predicated region
    $region38: #{retrain_net_forward.1} parent=1 // pred_check
      _
    $region39: #{retrain_net_forward.1} parent=1 // pred_check_branch
      %99 = sbr.rel (0) target = $region41
    $region40: #{retrain_net_forward.1} parent=1 // pred_region
      %101 = dma.done [#allocation3], 128
    $region41: #{retrain_net_forward.1} parent=1 // pred_fallthru
      _
    // Predicated region
    $region42: #{retrain_net_forward.1} parent=1 // pred_check
      _
    $region43: #{retrain_net_forward.1} parent=1 // pred_check_branch
      %103 = sbr.rel (0) target = $region45
    $region44: #{retrain_net_forward.1} parent=1 // pred_region
      %105 = dma.done [#allocation5], 256
    $region45: #{retrain_net_forward.1} parent=1 // pred_fallthru
      _
    // Predicated region
    $region46: #{retrain_net_forward.1} parent=1 // pred_check
      _
    $region47: #{retrain_net_forward.1} parent=1 // pred_check_branch
      %107 = sbr.rel (0) target = $region49
    $region48: #{retrain_net_forward.1} parent=1 // pred_region
      %109 = dma.done [#allocation5], 16
    $region49: #{retrain_net_forward.1} parent=1 // pred_fallthru
      _
    // Predicated region
    $region50: #{retrain_net_forward.1} parent=1 // pred_check
      _
    $region51: #{retrain_net_forward.1} parent=1 // pred_check_branch
      %111 = sbr.rel (0) target = $region53
    $region52: #{retrain_net_forward.1} parent=1 // pred_region
      %113 = dma.done [#allocation8], 1024
    $region53: #{retrain_net_forward.1} parent=1 // pred_fallthru
      _
    // Predicated region
    $region54: #{retrain_net_forward.1} parent=1 // pred_check
      _
    $region55: #{retrain_net_forward.1} parent=1 // pred_check_branch
      %115 = sbr.rel (0) target = $region57
    $region56: #{retrain_net_forward.1} parent=1 // pred_region
      %117 = dma.done [#allocation8], 1024
    $region57: #{retrain_net_forward.1} parent=1 // pred_fallthru
      _
    // Predicated region
    $region58: #{retrain_net_forward.1} parent=1 // pred_check
      _
    $region59: #{retrain_net_forward.1} parent=1 // pred_check_branch
      %119 = sbr.rel (0) target = $region61
    $region60: #{retrain_net_forward.1} parent=1 // pred_region
      %121 = dma.done [#allocation11], 1024
    $region61: #{retrain_net_forward.1} parent=1 // pred_fallthru
      _
    %v123 = vld [vmem:[#allocation2] sm:$0xff]
    %v124 = vpack.c.bf16 %v123, %v123
    %v125 = vld [vmem:[#allocation4] sm:$0xf]
    %v126 = vld [vmem:[#allocation4 + $0x4] sm:$0xf]
    %v127 = vld [vmem:[#allocation4 + $0x8] sm:$0xf]
    %v128 = vld [vmem:[#allocation4 + $0xc] sm:$0xf]
    %v129 = vld [vmem:[#allocation6] sm:$0x1]
    %v131 = vperm.slane %v129, 0
    %v137 = vunpack.c.l.b16 %v125
    %v138 = vunpack.c.l.b16 %v126
    %v139 = vunpack.c.l.b16 %v127
    %v140 = vunpack.c.l.b16 %v128
    %v141 = vpack.c.b16 %v138, %v137
    %v142 = vpack.c.b16 %v140, %v139
    %vm145 = vcmask 261120
    %v147 = vsel %vm145, %v124, 0
    %149 = vmatpush.bf16.msra.mxu0 0
    %150 = vmatpush.bf16.msra.mxu0 0
    %151 = vmatpush.bf16.msra.mxu0 0
    %152 = vmatpush.bf16.msra.mxu0 0
    %153 = vmatpush.bf16.msra.mxu0 0
    %154 = vmatpush.bf16.msra.mxu0 0
    %155 = vmatpush.bf16.msra.mxu0 %v142
    %156 = vmatpush.bf16.msra.mxu0 %v141
    %157 = vmatmul.bf16.gmra.mxu0 %v147
    %v158 = vpop.f32.mrf.mxu0
    %v159 = vadd.f32 %v131, %v158
    %v160 = vpop.f32.mrf.mxu0
    %161 = vdwg.mxu0
    %v162 = vmax.f32 %v159, 0.0
    %v163 = vpack.c.bf16 %v162, %v162
    %v164 = vld [vmem:[#allocation7] sm:$0xf]
    %v165 = vld [vmem:[#allocation7 + $0x4] sm:$0xf]
    %v166 = vld [vmem:[#allocation7 + $0x8] sm:$0xf]
    %v167 = vld [vmem:[#allocation7 + $0xc] sm:$0xf]
    %v168 = vld [vmem:[#allocation7 + $0x10] sm:$0xf]
    %v169 = vld [vmem:[#allocation7 + $0x14] sm:$0xf]
    %v170 = vld [vmem:[#allocation7 + $0x18] sm:$0xf]
    %v171 = vld [vmem:[#allocation7 + $0x1c] sm:$0xf]
    %v172 = vld [vmem:[#allocation7 + $0x20] sm:$0xf]
    %v173 = vld [vmem:[#allocation7 + $0x24] sm:$0xf]
    %v174 = vld [vmem:[#allocation7 + $0x28] sm:$0xf]
    %v175 = vld [vmem:[#allocation7 + $0x2c] sm:$0xf]
    %v176 = vld [vmem:[#allocation7 + $0x30] sm:$0xf]
    %v177 = vld [vmem:[#allocation7 + $0x34] sm:$0xf]
    %v178 = vld [vmem:[#allocation7 + $0x38] sm:$0xf]
    %v179 = vld [vmem:[#allocation7 + $0x3c] sm:$0xf]
    %v180 = vld [vmem:[%s4] sm:$0x1]
    %v182 = vperm.slane %v180, 0
    %v200 = vunpack.c.l.b16 %v164
    %v201 = vunpack.c.l.b16 %v165
    %v202 = vunpack.c.l.b16 %v166
    %v203 = vunpack.c.l.b16 %v167
    %v204 = vunpack.c.l.b16 %v168
    %v205 = vunpack.c.l.b16 %v169
    %v206 = vunpack.c.l.b16 %v170
    %v207 = vunpack.c.l.b16 %v171
    %v208 = vunpack.c.l.b16 %v172
    %v209 = vunpack.c.l.b16 %v173
    %v210 = vunpack.c.l.b16 %v174
    %v211 = vunpack.c.l.b16 %v175
    %v212 = vunpack.c.l.b16 %v176
    %v213 = vunpack.c.l.b16 %v177
    %v214 = vunpack.c.l.b16 %v178
    %v215 = vunpack.c.l.b16 %v179
    %v216 = vpack.c.b16 %v201, %v200
    %v217 = vpack.c.b16 %v203, %v202
    %v218 = vpack.c.b16 %v205, %v204
    %v219 = vpack.c.b16 %v207, %v206
    %v220 = vpack.c.b16 %v209, %v208
    %v221 = vpack.c.b16 %v211, %v210
    %v222 = vpack.c.b16 %v213, %v212
    %v223 = vpack.c.b16 %v215, %v214
    %232 = vmatpush.bf16.msra.mxu0 %v223
    %233 = vmatpush.bf16.msra.mxu0 %v222
    %234 = vmatpush.bf16.msra.mxu0 %v221
    %235 = vmatpush.bf16.msra.mxu0 %v220
    %236 = vmatpush.bf16.msra.mxu0 %v219
    %237 = vmatpush.bf16.msra.mxu0 %v218
    %238 = vmatpush.bf16.msra.mxu0 %v217
    %239 = vmatpush.bf16.msra.mxu0 %v216
    %240 = vmatmul.bf16.gmra.mxu0 %v163
    %v241 = vpop.f32.mrf.mxu0
    %v242 = vadd.f32 %v182, %v241
    %v243 = vpop.f32.mrf.mxu0
    %244 = vdwg.mxu0
    %v245 = vmax.f32 %v242, 0.0
    %v246 = vpack.c.bf16 %v245, %v245
    %v247 = vld [vmem:[#allocation9] sm:$0xf]
    %v248 = vld [vmem:[#allocation9 + $0x4] sm:$0xf]
    %v249 = vld [vmem:[#allocation9 + $0x8] sm:$0xf]
    %v250 = vld [vmem:[#allocation9 + $0xc] sm:$0xf]
    %v251 = vld [vmem:[#allocation9 + $0x10] sm:$0xf]
    %v252 = vld [vmem:[#allocation9 + $0x14] sm:$0xf]
    %v253 = vld [vmem:[#allocation9 + $0x18] sm:$0xf]
    %v254 = vld [vmem:[#allocation9 + $0x1c] sm:$0xf]
    %v255 = vld [vmem:[#allocation9 + $0x20] sm:$0xf]
    %v256 = vld [vmem:[#allocation9 + $0x24] sm:$0xf]
    %v257 = vld [vmem:[#allocation9 + $0x28] sm:$0xf]
    %v258 = vld [vmem:[#allocation9 + $0x2c] sm:$0xf]
    %v259 = vld [vmem:[#allocation9 + $0x30] sm:$0xf]
    %v260 = vld [vmem:[#allocation9 + $0x34] sm:$0xf]
    %v261 = vld [vmem:[#allocation9 + $0x38] sm:$0xf]
    %v262 = vld [vmem:[#allocation9 + $0x3c] sm:$0xf]
    %v263 = vld [vmem:[%s6] sm:$0x1]
    %v265 = vperm.slane %v263, 0
    %v283 = vunpack.c.l.b16 %v247
    %v284 = vunpack.c.l.b16 %v248
    %v285 = vunpack.c.l.b16 %v249
    %v286 = vunpack.c.l.b16 %v250
    %v287 = vunpack.c.l.b16 %v251
    %v288 = vunpack.c.l.b16 %v252
    %v289 = vunpack.c.l.b16 %v253
    %v290 = vunpack.c.l.b16 %v254
    %v291 = vunpack.c.l.b16 %v255
    %v292 = vunpack.c.l.b16 %v256
    %v293 = vunpack.c.l.b16 %v257
    %v294 = vunpack.c.l.b16 %v258
    %v295 = vunpack.c.l.b16 %v259
    %v296 = vunpack.c.l.b16 %v260
    %v297 = vunpack.c.l.b16 %v261
    %v298 = vunpack.c.l.b16 %v262
    %v299 = vpack.c.b16 %v284, %v283
    %v300 = vpack.c.b16 %v286, %v285
    %v301 = vpack.c.b16 %v288, %v287
    %v302 = vpack.c.b16 %v290, %v289
    %v303 = vpack.c.b16 %v292, %v291
    %v304 = vpack.c.b16 %v294, %v293
    %v305 = vpack.c.b16 %v296, %v295
    %v306 = vpack.c.b16 %v298, %v297
    %315 = vmatpush.bf16.msra.mxu0 %v306
    %316 = vmatpush.bf16.msra.mxu0 %v305
    %317 = vmatpush.bf16.msra.mxu0 %v304
    %318 = vmatpush.bf16.msra.mxu0 %v303
    %319 = vmatpush.bf16.msra.mxu0 %v302
    %320 = vmatpush.bf16.msra.mxu0 %v301
    %321 = vmatpush.bf16.msra.mxu0 %v300
    %322 = vmatpush.bf16.msra.mxu0 %v299
    %323 = vmatmul.bf16.gmra.mxu0 %v246
    %v324 = vpop.f32.mrf.mxu0
    %v325 = vadd.f32 %v265, %v324
    %v326 = vpop.f32.mrf.mxu0
    %327 = vdwg.mxu0
    %v328 = vmax.f32 %v325, 0.0
    %v329 = vpack.c.bf16 %v328, %v328
    %v330 = vld [vmem:[#allocation10] sm:$0xf]
    %v331 = vld [vmem:[#allocation10 + $0x4] sm:$0xf]
    %v332 = vld [vmem:[#allocation10 + $0x8] sm:$0xf]
    %v333 = vld [vmem:[#allocation10 + $0xc] sm:$0xf]
    %v334 = vld [vmem:[#allocation10 + $0x10] sm:$0xf]
    %v335 = vld [vmem:[#allocation10 + $0x14] sm:$0xf]
    %v336 = vld [vmem:[#allocation10 + $0x18] sm:$0xf]
    %v337 = vld [vmem:[#allocation10 + $0x1c] sm:$0xf]
    %v338 = vld [vmem:[#allocation10 + $0x20] sm:$0xf]
    %v339 = vld [vmem:[#allocation10 + $0x24] sm:$0xf]
    %v340 = vld [vmem:[#allocation10 + $0x28] sm:$0xf]
    %v341 = vld [vmem:[#allocation10 + $0x2c] sm:$0xf]
    %v342 = vld [vmem:[#allocation10 + $0x30] sm:$0xf]
    %v343 = vld [vmem:[#allocation10 + $0x34] sm:$0xf]
    %v344 = vld [vmem:[#allocation10 + $0x38] sm:$0xf]
    %v345 = vld [vmem:[#allocation10 + $0x3c] sm:$0xf]
    %v346 = vld [vmem:[%s8] sm:$0x1]
    %v348 = vperm.slane %v346, 0
    %v366 = vunpack.c.l.b16 %v330
    %v367 = vunpack.c.l.b16 %v331
    %v368 = vunpack.c.l.b16 %v332
    %v369 = vunpack.c.l.b16 %v333
    %v370 = vunpack.c.l.b16 %v334
    %v371 = vunpack.c.l.b16 %v335
    %v372 = vunpack.c.l.b16 %v336
    %v373 = vunpack.c.l.b16 %v337
    %v374 = vunpack.c.l.b16 %v338
    %v375 = vunpack.c.l.b16 %v339
    %v376 = vunpack.c.l.b16 %v340
    %v377 = vunpack.c.l.b16 %v341
    %v378 = vunpack.c.l.b16 %v342
    %v379 = vunpack.c.l.b16 %v343
    %v380 = vunpack.c.l.b16 %v344
    %v381 = vunpack.c.l.b16 %v345
    %v382 = vpack.c.b16 %v367, %v366
    %v383 = vpack.c.b16 %v369, %v368
    %v384 = vpack.c.b16 %v371, %v370
    %v385 = vpack.c.b16 %v373, %v372
    %v386 = vpack.c.b16 %v375, %v374
    %v387 = vpack.c.b16 %v377, %v376
    %v388 = vpack.c.b16 %v379, %v378
    %v389 = vpack.c.b16 %v381, %v380
    %398 = vmatpush.bf16.msra.mxu0 %v389
    %399 = vmatpush.bf16.msra.mxu0 %v388
    %400 = vmatpush.bf16.msra.mxu0 %v387
    %401 = vmatpush.bf16.msra.mxu0 %v386
    %402 = vmatpush.bf16.msra.mxu0 %v385
    %403 = vmatpush.bf16.msra.mxu0 %v384
    %404 = vmatpush.bf16.msra.mxu0 %v383
    %405 = vmatpush.bf16.msra.mxu0 %v382
    %406 = vmatmul.bf16.gmra.mxu0 %v329
    %v407 = vpop.f32.mrf.mxu0
    %v408 = vadd.f32 %v348, %v407
    %v409 = vpop.f32.mrf.mxu0
    %410 = vdwg.mxu0
    %vm411 = vcmask 7168
    %412 = vst.msk [vmem:[%s9] sm:$0xff] %vm411, %v408
    // Predicated region
    $region62: #{retrain_net_forward.1} parent=1 // pred_check
      _
    $region63: #{retrain_net_forward.1} parent=1 // pred_check_branch
      %414 = sbr.rel (0) target = $region65
    $region64: #{retrain_net_forward.1} parent=1 // pred_region
      _
    $region65: #{retrain_net_forward.1} parent=1 // pred_fallthru
      _
    // Predicated region
    $region66: #{retrain_net_forward.1} parent=1 // pred_check
      _
    $region67: #{retrain_net_forward.1} parent=1 // pred_check_branch
      %416 = sbr.rel (0) target = $region69
    $region68: #{retrain_net_forward.1} parent=1 // pred_region
      _
    $region69: #{retrain_net_forward.1} parent=1 // pred_fallthru
      _
    %417 = vsyncpa [#allocation3], 1
    %418 = vsyncpa [#allocation5], 1
    %419 = vsyncpa [#allocation8], 1
    %420 = vsyncpa [#allocation11], 1

</llo_original>
